<compile_context>
chip_gen: v6e
topology: v6e:2x2x1
jax: 0.10.0
libtpu: 0.0.40
codegen_flags: <defaults>
</compile_context>

<pallas_src>
import jax
import jax.numpy as jnp
from jax.experimental import pallas as pl
from jax.experimental.pallas import tpu as pltpu

HIDDEN = 64
# Default batch tile: multiple of 128 fills MXU rows; 512 amortizes the ~0.35us/step
# overhead and fits easily in v7x's 64 MiB VMEM even with double-buffering.
DEFAULT_TILE_B = 512
LANE = 128


def _round_up(n, m):
    return ((n + m - 1) // m) * m


def dnetwork_kernel(x_ref,
                    w1_ref, b1_ref,
                    w2_ref, b2_ref,
                    w3_ref, b3_ref,
                    w4_ref, b4_ref,
                    o_ref):
    """Fused (Linear+ReLU)x3 + Linear on one (TILE_B, obs) batch tile.

    x / weights are bf16 (MXU-native), accumulation is f32, bias-add / ReLU in f32,
    re-cast to bf16 between layers. Final store is lane-dense (out width padded to 128).
    """
    y = jnp.dot(x_ref[...], w1_ref[...], preferred_element_type=jnp.float32)
    y = jnp.maximum(y + b1_ref[...], 0.0).astype(jnp.bfloat16)

    y = jnp.dot(y, w2_ref[...], preferred_element_type=jnp.float32)
    y = jnp.maximum(y + b2_ref[...], 0.0).astype(jnp.bfloat16)

    y = jnp.dot(y, w3_ref[...], preferred_element_type=jnp.float32)
    y = jnp.maximum(y + b3_ref[...], 0.0).astype(jnp.bfloat16)

    y = jnp.dot(y, w4_ref[...], preferred_element_type=jnp.float32) + b4_ref[...]
    o_ref[...] = y.astype(o_ref.dtype)


def dnetwork_forward(x, params, tile_b=DEFAULT_TILE_B):
    """x: (B, observation_space). params: dict of transposed bf16 weights / f32 biases."""
    B, obs = x.shape
    action_space = params["w4"].shape[1]

    # ---- batch tiling / padding --------------------------------------------------
    TILE_B = min(tile_b, _round_up(B, 8))
    B_pad = _round_up(B, TILE_B)

    x = x.astype(jnp.bfloat16)
    if B_pad != B:
        x = jnp.pad(x, ((0, B_pad - B), (0, 0)))

    # ---- lane-dense output: pad final layer width to a multiple of 128 ------------
    A_pad = _round_up(action_space, LANE)
    w4 = params["w4"]
    b4 = params["b4"]
    if A_pad != action_space:
        w4 = jnp.pad(w4, ((0, 0), (0, A_pad - action_space)))
        b4 = jnp.pad(b4, ((0, 0), (0, A_pad - action_space)))

    grid = (B_pad // TILE_B,)

    def resident_spec(arr):
        nd = arr.ndim
        # Same block index every grid step -> Pallas keeps it VMEM-resident (no re-DMA).
        return pl.BlockSpec(arr.shape, lambda i, _nd=nd: (0,) * _nd)

    weight_args = (params["w1"], params["b1"],
                   params["w2"], params["b2"],
                   params["w3"], params["b3"],
                   w4, b4)

    in_specs = [pl.BlockSpec((TILE_B, obs), lambda i: (i, 0))]
    in_specs += [resident_spec(a) for a in weight_args]
    out_spec = pl.BlockSpec((TILE_B, A_pad), lambda i: (i, 0))

    flops = 2 * B_pad * (obs * HIDDEN + HIDDEN * HIDDEN * 2 + HIDDEN * A_pad)
    bytes_accessed = (x.size * x.dtype.itemsize
                      + sum(a.size * a.dtype.itemsize for a in weight_args)
                      + B_pad * A_pad * 4)

    out = pl.pallas_call(
        dnetwork_kernel,
        out_shape=jax.ShapeDtypeStruct((B_pad, A_pad), jnp.float32),
        grid=grid,
        in_specs=in_specs,
        out_specs=out_spec,
        compiler_params=pltpu.CompilerParams(
            dimension_semantics=("parallel",)),
        cost_estimate=pl.CostEstimate(
            flops=flops, transcendentals=0, bytes_accessed=bytes_accessed),
    )(x, *weight_args)

    return out[:B, :action_space]


def init_params(key, observation_space, action_space):
    """Deterministic init mimicking nn.Linear default (uniform +/- 1/sqrt(fan_in)).
    Weights stored (in_features, out_features) in bf16; biases as (1, fan_out) f32."""
    dims = [(observation_space, HIDDEN), (HIDDEN, HIDDEN),
            (HIDDEN, HIDDEN), (HIDDEN, action_space)]
    params = {}
    for i, (fan_in, fan_out) in enumerate(dims, start=1):
        key, kw, kb = jax.random.split(key, 3)
        bound = 1.0 / (fan_in ** 0.5)
        w = jax.random.uniform(kw, (fan_in, fan_out), jnp.float32, -bound, bound)
        b = jax.random.uniform(kb, (1, fan_out), jnp.float32, -bound, bound)
        params[f"w{i}"] = w.astype(jnp.bfloat16)
        params[f"b{i}"] = b
    return params


def reference_forward(x, params):
    """Pure-JAX f32 reference using the same (bf16-rounded) weight values."""
    y = x.astype(jnp.float32)
    for i in range(1, 4):
        y = jnp.maximum(y @ params[f"w{i}"].astype(jnp.float32) + params[f"b{i}"], 0.0)
    return y @ params["w4"].astype(jnp.float32) + params["b4"]


if __name__ == "__main__":
    observation_space = 8
    action_space = 4
    batch = 8

    key = jax.random.PRNGKey(0)
    key, kx = jax.random.split(key)
    x = jax.random.normal(kx, (batch, observation_space), jnp.float32)

    params = init_params(key, observation_space, action_space)

    out = dnetwork_forward(x, params)
    out = jax.block_until_ready(out)

    ref = reference_forward(x, params)
    assert out.shape == (batch, action_space), out.shape
    # bf16 matmul operands with f32 accumulation -> small drift vs f32 reference.
    assert jnp.allclose(out, ref, atol=5e-2, rtol=5e-2), (
        f"mismatch vs reference: max abs diff = {jnp.max(jnp.abs(out - ref))}")

    print("KERNEL_OK")
</pallas_src>

<mosaic_0001>
module attributes {stable_mosaic.version = 11 : i64} {
  func.func @dnetwork_kernel(%arg0: i32, %arg1: memref<8x8xbf16, #tpu.memory_space<vmem>>, %arg2: memref<8x64xbf16, #tpu.memory_space<vmem>>, %arg3: memref<1x64xf32, #tpu.memory_space<vmem>>, %arg4: memref<64x64xbf16, #tpu.memory_space<vmem>>, %arg5: memref<1x64xf32, #tpu.memory_space<vmem>>, %arg6: memref<64x64xbf16, #tpu.memory_space<vmem>>, %arg7: memref<1x64xf32, #tpu.memory_space<vmem>>, %arg8: memref<64x128xbf16, #tpu.memory_space<vmem>>, %arg9: memref<1x128xf32, #tpu.memory_space<vmem>>, %arg10: memref<8x128xf32, #tpu.memory_space<vmem>>) attributes {dimension_semantics = [#tpu.dimension_semantics<parallel>], iteration_bounds = array<i64: 1>, scalar_prefetch = 0 : i64, scratch_operands = 0 : i64, tpu.core_type = #tpu.core_type<tc>, window_params = [{transform_indices = @transform_0, window_bounds = array<i64: 8, 8>}, {pipeline_mode = #tpu.pipeline_mode<synchronous>, transform_indices = @transform_1, window_bounds = array<i64: 8, 64>}, {pipeline_mode = #tpu.pipeline_mode<synchronous>, transform_indices = @transform_2, window_bounds = array<i64: 1, 64>}, {pipeline_mode = #tpu.pipeline_mode<synchronous>, transform_indices = @transform_3, window_bounds = array<i64: 64, 64>}, {pipeline_mode = #tpu.pipeline_mode<synchronous>, transform_indices = @transform_4, window_bounds = array<i64: 1, 64>}, {pipeline_mode = #tpu.pipeline_mode<synchronous>, transform_indices = @transform_5, window_bounds = array<i64: 64, 64>}, {pipeline_mode = #tpu.pipeline_mode<synchronous>, transform_indices = @transform_6, window_bounds = array<i64: 1, 64>}, {pipeline_mode = #tpu.pipeline_mode<synchronous>, transform_indices = @transform_7, window_bounds = array<i64: 64, 128>}, {pipeline_mode = #tpu.pipeline_mode<synchronous>, transform_indices = @transform_8, window_bounds = array<i64: 1, 128>}, {transform_indices = @transform_9, window_bounds = array<i64: 8, 128>}]} {
    %c0 = arith.constant 0 : index
    %c0_0 = arith.constant 0 : index
    %0 = vector.load %arg1[%c0, %c0_0] : memref<8x8xbf16, #tpu.memory_space<vmem>>, vector<8x8xbf16>
    %c0_1 = arith.constant 0 : index
    %c0_2 = arith.constant 0 : index
    %1 = vector.load %arg2[%c0_1, %c0_2] : memref<8x64xbf16, #tpu.memory_space<vmem>>, vector<8x64xbf16>
    %cst = arith.constant dense<0.000000e+00> : vector<8x64xf32>
    %2 = tpu.matmul %0, %1, %cst {dimension_numbers = #tpu.dot_dimension_numbers<[1], [0], [0], [1], [0, 0, 1, 1], [], []>} : vector<8x8xbf16>, vector<8x64xbf16>, vector<8x64xf32> -> vector<8x64xf32>
    %c0_3 = arith.constant 0 : index
    %c0_4 = arith.constant 0 : index
    %3 = vector.load %arg3[%c0_3, %c0_4] : memref<1x64xf32, #tpu.memory_space<vmem>>, vector<1x64xf32>
    %4 = vector.broadcast %3 : vector<1x64xf32> to vector<8x64xf32>
    %5 = arith.addf %2, %4 : vector<8x64xf32>
    %cst_5 = arith.constant 0.000000e+00 : f32
    %6 = vector.broadcast %cst_5 : f32 to vector<8x64xf32>
    %7 = arith.maximumf %5, %6 : vector<8x64xf32>
    %8 = arith.truncf %7 : vector<8x64xf32> to vector<8x64xbf16>
    %c0_6 = arith.constant 0 : index
    %c0_7 = arith.constant 0 : index
    %9 = vector.load %arg4[%c0_6, %c0_7] : memref<64x64xbf16, #tpu.memory_space<vmem>>, vector<64x64xbf16>
    %cst_8 = arith.constant dense<0.000000e+00> : vector<8x64xf32>
    %10 = tpu.matmul %8, %9, %cst_8 {dimension_numbers = #tpu.dot_dimension_numbers<[1], [0], [0], [1], [0, 0, 1, 1], [], []>} : vector<8x64xbf16>, vector<64x64xbf16>, vector<8x64xf32> -> vector<8x64xf32>
    %c0_9 = arith.constant 0 : index
    %c0_10 = arith.constant 0 : index
    %11 = vector.load %arg5[%c0_9, %c0_10] : memref<1x64xf32, #tpu.memory_space<vmem>>, vector<1x64xf32>
    %12 = vector.broadcast %11 : vector<1x64xf32> to vector<8x64xf32>
    %13 = arith.addf %10, %12 : vector<8x64xf32>
    %cst_11 = arith.constant 0.000000e+00 : f32
    %14 = vector.broadcast %cst_11 : f32 to vector<8x64xf32>
    %15 = arith.maximumf %13, %14 : vector<8x64xf32>
    %16 = arith.truncf %15 : vector<8x64xf32> to vector<8x64xbf16>
    %c0_12 = arith.constant 0 : index
    %c0_13 = arith.constant 0 : index
    %17 = vector.load %arg6[%c0_12, %c0_13] : memref<64x64xbf16, #tpu.memory_space<vmem>>, vector<64x64xbf16>
    %cst_14 = arith.constant dense<0.000000e+00> : vector<8x64xf32>
    %18 = tpu.matmul %16, %17, %cst_14 {dimension_numbers = #tpu.dot_dimension_numbers<[1], [0], [0], [1], [0, 0, 1, 1], [], []>} : vector<8x64xbf16>, vector<64x64xbf16>, vector<8x64xf32> -> vector<8x64xf32>
    %c0_15 = arith.constant 0 : index
    %c0_16 = arith.constant 0 : index
    %19 = vector.load %arg7[%c0_15, %c0_16] : memref<1x64xf32, #tpu.memory_space<vmem>>, vector<1x64xf32>
    %20 = vector.broadcast %19 : vector<1x64xf32> to vector<8x64xf32>
    %21 = arith.addf %18, %20 : vector<8x64xf32>
    %cst_17 = arith.constant 0.000000e+00 : f32
    %22 = vector.broadcast %cst_17 : f32 to vector<8x64xf32>
    %23 = arith.maximumf %21, %22 : vector<8x64xf32>
    %24 = arith.truncf %23 : vector<8x64xf32> to vector<8x64xbf16>
    %c0_18 = arith.constant 0 : index
    %c0_19 = arith.constant 0 : index
    %25 = vector.load %arg8[%c0_18, %c0_19] : memref<64x128xbf16, #tpu.memory_space<vmem>>, vector<64x128xbf16>
    %cst_20 = arith.constant dense<0.000000e+00> : vector<8x128xf32>
    %26 = tpu.matmul %24, %25, %cst_20 {dimension_numbers = #tpu.dot_dimension_numbers<[1], [0], [0], [1], [0, 0, 1, 1], [], []>} : vector<8x64xbf16>, vector<64x128xbf16>, vector<8x128xf32> -> vector<8x128xf32>
    %c0_21 = arith.constant 0 : index
    %c0_22 = arith.constant 0 : index
    %27 = vector.load %arg9[%c0_21, %c0_22] : memref<1x128xf32, #tpu.memory_space<vmem>>, vector<1x128xf32>
    %28 = vector.broadcast %27 : vector<1x128xf32> to vector<8x128xf32>
    %29 = arith.addf %26, %28 : vector<8x128xf32>
    %c0_23 = arith.constant 0 : index
    %c0_24 = arith.constant 0 : index
    %30 = vector.load %arg10[%c0_23, %c0_24] : memref<8x128xf32, #tpu.memory_space<vmem>>, vector<8x128xf32>
    tpu.vector_store %arg10[%c0_23, %c0_24], %29 {strides = array<i32>} : memref<8x128xf32, #tpu.memory_space<vmem>>, vector<8x128xf32>,
    return
  }
  func.func @transform_0(%arg0: i32) -> (i32, i32) {
    %c0_i32 = arith.constant 0 : i32
    %c0_i32_0 = arith.constant 0 : i32
    return %arg0, %c0_i32 : i32, i32
  }
  func.func @transform_1(%arg0: i32) -> (i32, i32) {
    %c0_i32 = arith.constant 0 : i32
    %c0_i32_0 = arith.constant 0 : i32
    %c0_i32_1 = arith.constant 0 : i32
    return %c0_i32, %c0_i32_0 : i32, i32
  }
  func.func @transform_2(%arg0: i32) -> (i32, i32) {
    %c0_i32 = arith.constant 0 : i32
    %c0_i32_0 = arith.constant 0 : i32
    %c0_i32_1 = arith.constant 0 : i32
    return %c0_i32, %c0_i32_0 : i32, i32
  }
  func.func @transform_3(%arg0: i32) -> (i32, i32) {
    %c0_i32 = arith.constant 0 : i32
    %c0_i32_0 = arith.constant 0 : i32
    %c0_i32_1 = arith.constant 0 : i32
    return %c0_i32, %c0_i32_0 : i32, i32
  }
  func.func @transform_4(%arg0: i32) -> (i32, i32) {
    %c0_i32 = arith.constant 0 : i32
    %c0_i32_0 = arith.constant 0 : i32
    %c0_i32_1 = arith.constant 0 : i32
    return %c0_i32, %c0_i32_0 : i32, i32
  }
  func.func @transform_5(%arg0: i32) -> (i32, i32) {
    %c0_i32 = arith.constant 0 : i32
    %c0_i32_0 = arith.constant 0 : i32
    %c0_i32_1 = arith.constant 0 : i32
    return %c0_i32, %c0_i32_0 : i32, i32
  }
  func.func @transform_6(%arg0: i32) -> (i32, i32) {
    %c0_i32 = arith.constant 0 : i32
    %c0_i32_0 = arith.constant 0 : i32
    %c0_i32_1 = arith.constant 0 : i32
    return %c0_i32, %c0_i32_0 : i32, i32
  }
  func.func @transform_7(%arg0: i32) -> (i32, i32) {
    %c0_i32 = arith.constant 0 : i32
    %c0_i32_0 = arith.constant 0 : i32
    %c0_i32_1 = arith.constant 0 : i32
    return %c0_i32, %c0_i32_0 : i32, i32
  }
  func.func @transform_8(%arg0: i32) -> (i32, i32) {
    %c0_i32 = arith.constant 0 : i32
    %c0_i32_0 = arith.constant 0 : i32
    %c0_i32_1 = arith.constant 0 : i32
    return %c0_i32, %c0_i32_0 : i32, i32
  }
  func.func @transform_9(%arg0: i32) -> (i32, i32) {
    %c0_i32 = arith.constant 0 : i32
    %c0_i32_0 = arith.constant 0 : i32
    return %arg0, %c0_i32 : i32, i32
  }
}

</mosaic_0001>

<llo_original>
// kernel: tpu_custom_call.1
$region0: #{tpu_custom_call.1}
  #allocation0 [shape = 'u32[]', space=smem, size = 0x4, offset = 0x4, fixed_abs, tag = 'smem constant byte address 0x4 - core index']
  #allocation1 [shape = 'u32[144,128]{1,0:T(1,128)}', space=vmem, size = 0x12000, scoped, tag = 'internal scratch']
  %s0 = inlined_call_operand.hbm [shape: bf16[8,8], index: 0, kind: input, shape index: {}]
  %s1 = inlined_call_operand.hbm [shape: bf16[8,64], index: 1, kind: input, shape index: {}]
  %s2 = inlined_call_operand.vmem [shape: f32[1,64], index: 2, kind: input, shape index: {}]
  %s3 = inlined_call_operand.hbm [shape: bf16[64,64], index: 3, kind: input, shape index: {}]
  %s4 = inlined_call_operand.vmem [shape: f32[1,64], index: 4, kind: input, shape index: {}]
  %s5 = inlined_call_operand.hbm [shape: bf16[64,64], index: 5, kind: input, shape index: {}]
  %s6 = inlined_call_operand.vmem [shape: f32[1,64], index: 6, kind: input, shape index: {}]
  %s7 = inlined_call_operand.hbm [shape: bf16[64,128], index: 7, kind: input, shape index: {}]
  %s8 = inlined_call_operand.vmem [shape: f32[1,128], index: 8, kind: input, shape index: {}]
  %s9 = inlined_call_operand.hbm [shape: f32[8,128], index: 9, kind: output, shape index: {}]
  %s10 = sld [smem:[#allocation0]]
  $region66: #{tpu_custom_call.1} parent=0
    _
  %s12 = ssub.s32 1, %s10
  %s13 = scalar_select 0, %s12, %s10
  $region1: #{tpu_custom_call.1} parent=0
    #allocation2 [shape = 'u8[2048]{0}', space=vmem, size = 0x800, scoped, tag = 'input window, operand 0, single buffered']
    #allocation3 [shape = 's32[1]{0}', space=sflag, size = 0x4, scoped, tag = 'scoped memory for tpu_custom_call.1']
    #allocation4 [shape = 's32[1]{0}', space=sflag, size = 0x4, scoped, tag = 'scoped memory for tpu_custom_call.1']
    #allocation5 [shape = 'u8[2048]{0}', space=vmem, size = 0x800, scoped, tag = 'input window, operand 1, single buffered']
    #allocation6 [shape = 's32[1]{0}', space=sflag, size = 0x4, scoped, tag = 'scoped memory for tpu_custom_call.1']
    #allocation7 [shape = 'u8[16384]{0}', space=vmem, size = 0x4000, scoped, tag = 'input window, operand 3, single buffered']
    #allocation8 [shape = 'u8[16384]{0}', space=vmem, size = 0x4000, scoped, tag = 'input window, operand 5, single buffered']
    #allocation9 [shape = 's32[1]{0}', space=sflag, size = 0x4, scoped, tag = 'scoped memory for tpu_custom_call.1']
    #allocation10 [shape = 'u8[16384]{0}', space=vmem, size = 0x4000, scoped, tag = 'input window, operand 7, single buffered']
    #allocation11 [shape = 'u8[4096]{0}', space=vmem, size = 0x1000, scoped, tag = 'output window, operand 0, single buffered']
    %14 = vsyncpa [#allocation3], 0
    %15 = vsyncpa [#allocation6], 0
    %16 = vsyncpa [#allocation9], 0
    %17 = vsyncpa [#allocation4], 0
    // Predicated region
    $region2: #{tpu_custom_call.1} parent=1 // pred_check
      _
    $region3: #{tpu_custom_call.1} parent=1 // pred_check_branch
      %19 = sbr.rel (0) target = $region5
    $region4: #{tpu_custom_call.1} parent=1 // pred_region
      %s21 = ssub.s32 64, 64
      %22 = vsyncadd [#allocation3], %s21
      %s24 = sshll.u32 [#allocation2], 4
      %s25 = int_to_ptr.vmem [resolvable:$true] %s24
      %27 = dma.hbm_to_vmem [thread:$0]  %s0, 64, %s25, [#allocation3]
    $region5: #{tpu_custom_call.1} parent=1 // pred_fallthru
      _
    // Predicated region
    $region6: #{tpu_custom_call.1} parent=1 // pred_check
      _
    $region7: #{tpu_custom_call.1} parent=1 // pred_check_branch
      %29 = sbr.rel (0) target = $region9
    $region8: #{tpu_custom_call.1} parent=1 // pred_region
      %s31 = ssub.s32 64, 64
      %32 = vsyncadd [#allocation6], %s31
      %s34 = sshll.u32 [#allocation5], 4
      %s35 = int_to_ptr.vmem [resolvable:$true] %s34
      %37 = dma.hbm_to_vmem [thread:$0]  %s1, 64, %s35, [#allocation6]
    $region9: #{tpu_custom_call.1} parent=1 // pred_fallthru
      _
    // Predicated region
    $region10: #{tpu_custom_call.1} parent=1 // pred_check
      _
    $region11: #{tpu_custom_call.1} parent=1 // pred_check_branch
      %39 = sbr.rel (0) target = $region13
    $region12: #{tpu_custom_call.1} parent=1 // pred_region
      _
    $region13: #{tpu_custom_call.1} parent=1 // pred_fallthru
      _
    // Predicated region
    $region14: #{tpu_custom_call.1} parent=1 // pred_check
      _
    $region15: #{tpu_custom_call.1} parent=1 // pred_check_branch
      %41 = sbr.rel (0) target = $region17
    $region16: #{tpu_custom_call.1} parent=1 // pred_region
      %s43 = ssub.s32 512, 512
      %44 = vsyncadd [#allocation6], %s43
      %s45 = sshll.u32 [#allocation7], 4
      %s46 = int_to_ptr.vmem [resolvable:$true] %s45
      %51 = dma.hbm_to_vmem [thread:$0]  %s3, 512, %s46, [#allocation6], 64, 64, 4
    $region17: #{tpu_custom_call.1} parent=1 // pred_fallthru
      _
    // Predicated region
    $region18: #{tpu_custom_call.1} parent=1 // pred_check
      _
    $region19: #{tpu_custom_call.1} parent=1 // pred_check_branch
      %53 = sbr.rel (0) target = $region21
    $region20: #{tpu_custom_call.1} parent=1 // pred_region
      _
    $region21: #{tpu_custom_call.1} parent=1 // pred_fallthru
      _
    // Predicated region
    $region22: #{tpu_custom_call.1} parent=1 // pred_check
      _
    $region23: #{tpu_custom_call.1} parent=1 // pred_check_branch
      %55 = sbr.rel (0) target = $region25
    $region24: #{tpu_custom_call.1} parent=1 // pred_region
      %s57 = ssub.s32 512, 512
      %58 = vsyncadd [#allocation9], %s57
      %s59 = sshll.u32 [#allocation8], 4
      %s60 = int_to_ptr.vmem [resolvable:$true] %s59
      %65 = dma.hbm_to_vmem [thread:$0]  %s5, 512, %s60, [#allocation9], 64, 64, 4
    $region25: #{tpu_custom_call.1} parent=1 // pred_fallthru
      _
    // Predicated region
    $region26: #{tpu_custom_call.1} parent=1 // pred_check
      _
    $region27: #{tpu_custom_call.1} parent=1 // pred_check_branch
      %67 = sbr.rel (0) target = $region29
    $region28: #{tpu_custom_call.1} parent=1 // pred_region
      _
    $region29: #{tpu_custom_call.1} parent=1 // pred_fallthru
      _
    // Predicated region
    $region30: #{tpu_custom_call.1} parent=1 // pred_check
      _
    $region31: #{tpu_custom_call.1} parent=1 // pred_check_branch
      %69 = sbr.rel (0) target = $region33
    $region32: #{tpu_custom_call.1} parent=1 // pred_region
      %s71 = ssub.s32 512, 512
      %72 = vsyncadd [#allocation9], %s71
      %s73 = sshll.u32 [#allocation10], 4
      %s74 = int_to_ptr.vmem [resolvable:$true] %s73
      %79 = dma.hbm_to_vmem [thread:$0]  %s7, 512, %s74, [#allocation9], 64, 64, 4
    $region33: #{tpu_custom_call.1} parent=1 // pred_fallthru
      _
    // Predicated region
    $region34: #{tpu_custom_call.1} parent=1 // pred_check
      _
    $region35: #{tpu_custom_call.1} parent=1 // pred_check_branch
      %81 = sbr.rel (0) target = $region37
    $region36: #{tpu_custom_call.1} parent=1 // pred_region
      _
    $region37: #{tpu_custom_call.1} parent=1 // pred_fallthru
      _
    // Predicated region
    $region38: #{tpu_custom_call.1} parent=1 // pred_check
      _
    $region39: #{tpu_custom_call.1} parent=1 // pred_check_branch
      %83 = sbr.rel (0) target = $region41
    $region40: #{tpu_custom_call.1} parent=1 // pred_region
      %84 = dma.done [#allocation3], 64
    $region41: #{tpu_custom_call.1} parent=1 // pred_fallthru
      _
    // Predicated region
    $region42: #{tpu_custom_call.1} parent=1 // pred_check
      _
    $region43: #{tpu_custom_call.1} parent=1 // pred_check_branch
      %86 = sbr.rel (0) target = $region45
    $region44: #{tpu_custom_call.1} parent=1 // pred_region
      %87 = dma.done [#allocation6], 64
    $region45: #{tpu_custom_call.1} parent=1 // pred_fallthru
      _
    // Predicated region
    $region46: #{tpu_custom_call.1} parent=1 // pred_check
      _
    $region47: #{tpu_custom_call.1} parent=1 // pred_check_branch
      %89 = sbr.rel (0) target = $region49
    $region48: #{tpu_custom_call.1} parent=1 // pred_region
      %90 = dma.done [#allocation6], 512
    $region49: #{tpu_custom_call.1} parent=1 // pred_fallthru
      _
    // Predicated region
    $region50: #{tpu_custom_call.1} parent=1 // pred_check
      _
    $region51: #{tpu_custom_call.1} parent=1 // pred_check_branch
      %92 = sbr.rel (0) target = $region53
    $region52: #{tpu_custom_call.1} parent=1 // pred_region
      %93 = dma.done [#allocation9], 512
    $region53: #{tpu_custom_call.1} parent=1 // pred_fallthru
      _
    // Predicated region
    $region54: #{tpu_custom_call.1} parent=1 // pred_check
      _
    $region55: #{tpu_custom_call.1} parent=1 // pred_check_branch
      %95 = sbr.rel (0) target = $region57
    $region56: #{tpu_custom_call.1} parent=1 // pred_region
      %96 = dma.done [#allocation9], 512
    $region57: #{tpu_custom_call.1} parent=1 // pred_fallthru
      _
    %v98 = vld [vmem:[#allocation2] sm:$0xf]
    %v99 = vld [vmem:[#allocation5] sm:$0xf]
    %v100 = vld [vmem:[%s2] sm:$0x1]
    %v102 = vlaneseq
    %v103 = vshrl.u32 %v102, 7
    %v104 = vsub.s32 0, %v103
    %v105 = vrot.slane %v100, %v104
    %vm107 = vcmask 64512
    %v109 = vsel %vm107, %v98, 0
    %vm111 = vcmask 1043456
    %v113 = vsel %vm111, %v99, 0
    %115 = vmatprep.subr.bf16.mxu0 0
    %116 = vmatpush1.bf16.msra.mxu0 0
    %117 = vmatprep.subr.bf16.mxu0 0
    %118 = vmatpush1.bf16.msra.mxu0 0
    %119 = vmatprep.subr.bf16.mxu0 0
    %120 = vmatpush1.bf16.msra.mxu0 0
    %121 = vmatprep.subr.bf16.mxu0 0
    %122 = vmatpush1.bf16.msra.mxu0 0
    %123 = vmatprep.subr.bf16.mxu0 0
    %124 = vmatpush1.bf16.msra.mxu0 0
    %125 = vmatprep.subr.bf16.mxu0 0
    %126 = vmatpush1.bf16.msra.mxu0 0
    %127 = vmatprep.subr.bf16.mxu0 0
    %128 = vmatpush1.bf16.msra.mxu0 0
    %129 = vmatprep.subr.bf16.mxu0 0
    %130 = vmatpush1.bf16.msra.mxu0 %v113
    %131 = vmatprep.subr.bf16.mxu0 0
    %132 = vmatpush2.bf16.msra.mxu0 0
    %133 = vmatprep.subr.bf16.mxu0 0
    %134 = vmatpush2.bf16.msra.mxu0 0
    %135 = vmatprep.subr.bf16.mxu0 0
    %136 = vmatpush2.bf16.msra.mxu0 0
    %137 = vmatprep.subr.bf16.mxu0 0
    %138 = vmatpush2.bf16.msra.mxu0 0
    %139 = vmatprep.subr.bf16.mxu0 0
    %140 = vmatpush2.bf16.msra.mxu0 0
    %141 = vmatprep.subr.bf16.mxu0 0
    %142 = vmatpush2.bf16.msra.mxu0 0
    %143 = vmatprep.subr.bf16.mxu0 0
    %144 = vmatpush2.bf16.msra.mxu0 0
    %145 = vmatprep.subr.bf16.mxu0 0
    %146 = vmatpush2.bf16.msra.mxu0 0
    %147 = vmatprep.mubr.bf16.mxu0 0
    %148 = vmatmul.mubr.bf16.gmra.mxu0 %v109
    %v149 = vpop.f32.mrf.mxu0
    %v150 = vadd.f32 %v105, %v149
    %v151 = vpop.f32.mrf.mxu0
    %v152 = vpop.f32.mrf.mxu0
    %v153 = vpop.f32.mrf.mxu0
    %154 = vdwg.mxu0
    %v155 = vmax.f32 %v150, 0.0
    %v156 = vpack.c.bf16 %v155, %v155
    %v157 = vld [vmem:[#allocation7] sm:$0xf]
    %v158 = vld [vmem:[#allocation7 + $0x4] sm:$0xf]
    %v159 = vld [vmem:[#allocation7 + $0x8] sm:$0xf]
    %v160 = vld [vmem:[#allocation7 + $0xc] sm:$0xf]
    %v161 = vld [vmem:[#allocation7 + $0x10] sm:$0xf]
    %v162 = vld [vmem:[#allocation7 + $0x14] sm:$0xf]
    %v163 = vld [vmem:[#allocation7 + $0x18] sm:$0xf]
    %v164 = vld [vmem:[#allocation7 + $0x1c] sm:$0xf]
    %v165 = vld [vmem:[%s4] sm:$0x1]
    %v167 = vlaneseq
    %v168 = vshrl.u32 %v167, 7
    %v169 = vsub.s32 0, %v168
    %v170 = vrot.slane %v165, %v169
    %v180 = vunpack.c.l.b16 %v157
    %v181 = vunpack.c.l.b16 %v158
    %v182 = vunpack.c.l.b16 %v159
    %v183 = vunpack.c.l.b16 %v160
    %v184 = vunpack.c.l.b16 %v161
    %v185 = vunpack.c.l.b16 %v162
    %v186 = vunpack.c.l.b16 %v163
    %v187 = vunpack.c.l.b16 %v164
    %v188 = vpack.c.b16 %v181, %v180
    %v189 = vpack.c.b16 %v183, %v182
    %v190 = vpack.c.b16 %v185, %v184
    %v191 = vpack.c.b16 %v187, %v186
    %vm196 = vcmask 523264
    %v198 = vsel %vm196, %v156, 0
    %200 = vmatprep.subr.bf16.mxu0 0
    %201 = vmatpush1.bf16.msra.mxu0 0
    %202 = vmatprep.subr.bf16.mxu0 0
    %203 = vmatpush1.bf16.msra.mxu0 0
    %204 = vmatprep.subr.bf16.mxu0 0
    %205 = vmatpush1.bf16.msra.mxu0 0
    %206 = vmatprep.subr.bf16.mxu0 0
    %207 = vmatpush1.bf16.msra.mxu0 0
    %208 = vmatprep.subr.bf16.mxu0 0
    %209 = vmatpush1.bf16.msra.mxu0 %v191
    %210 = vmatprep.subr.bf16.mxu0 0
    %211 = vmatpush1.bf16.msra.mxu0 %v190
    %212 = vmatprep.subr.bf16.mxu0 0
    %213 = vmatpush1.bf16.msra.mxu0 %v189
    %214 = vmatprep.subr.bf16.mxu0 0
    %215 = vmatpush1.bf16.msra.mxu0 %v188
    %216 = vmatprep.subr.bf16.mxu0 0
    %217 = vmatpush2.bf16.msra.mxu0 0
    %218 = vmatprep.subr.bf16.mxu0 0
    %219 = vmatpush2.bf16.msra.mxu0 0
    %220 = vmatprep.subr.bf16.mxu0 0
    %221 = vmatpush2.bf16.msra.mxu0 0
    %222 = vmatprep.subr.bf16.mxu0 0
    %223 = vmatpush2.bf16.msra.mxu0 0
    %224 = vmatprep.subr.bf16.mxu0 0
    %225 = vmatpush2.bf16.msra.mxu0 0
    %226 = vmatprep.subr.bf16.mxu0 0
    %227 = vmatpush2.bf16.msra.mxu0 0
    %228 = vmatprep.subr.bf16.mxu0 0
    %229 = vmatpush2.bf16.msra.mxu0 0
    %230 = vmatprep.subr.bf16.mxu0 0
    %231 = vmatpush2.bf16.msra.mxu0 0
    %232 = vmatprep.mubr.bf16.mxu0 0
    %233 = vmatmul.mubr.bf16.gmra.mxu0 %v198
    %v234 = vpop.f32.mrf.mxu0
    %v235 = vadd.f32 %v170, %v234
    %v236 = vpop.f32.mrf.mxu0
    %v237 = vpop.f32.mrf.mxu0
    %v238 = vpop.f32.mrf.mxu0
    %239 = vdwg.mxu0
    %v240 = vmax.f32 %v235, 0.0
    %v241 = vpack.c.bf16 %v240, %v240
    %v242 = vld [vmem:[#allocation8] sm:$0xf]
    %v243 = vld [vmem:[#allocation8 + $0x4] sm:$0xf]
    %v244 = vld [vmem:[#allocation8 + $0x8] sm:$0xf]
    %v245 = vld [vmem:[#allocation8 + $0xc] sm:$0xf]
    %v246 = vld [vmem:[#allocation8 + $0x10] sm:$0xf]
    %v247 = vld [vmem:[#allocation8 + $0x14] sm:$0xf]
    %v248 = vld [vmem:[#allocation8 + $0x18] sm:$0xf]
    %v249 = vld [vmem:[#allocation8 + $0x1c] sm:$0xf]
    %v250 = vld [vmem:[%s6] sm:$0x1]
    %v252 = vlaneseq
    %v253 = vshrl.u32 %v252, 7
    %v254 = vsub.s32 0, %v253
    %v255 = vrot.slane %v250, %v254
    %v265 = vunpack.c.l.b16 %v242
    %v266 = vunpack.c.l.b16 %v243
    %v267 = vunpack.c.l.b16 %v244
    %v268 = vunpack.c.l.b16 %v245
    %v269 = vunpack.c.l.b16 %v246
    %v270 = vunpack.c.l.b16 %v247
    %v271 = vunpack.c.l.b16 %v248
    %v272 = vunpack.c.l.b16 %v249
    %v273 = vpack.c.b16 %v266, %v265
    %v274 = vpack.c.b16 %v268, %v267
    %v275 = vpack.c.b16 %v270, %v269
    %v276 = vpack.c.b16 %v272, %v271
    %v282 = vsel %vm196, %v241, 0
    %284 = vmatprep.subr.bf16.mxu0 0
    %285 = vmatpush1.bf16.msra.mxu0 0
    %286 = vmatprep.subr.bf16.mxu0 0
    %287 = vmatpush1.bf16.msra.mxu0 0
    %288 = vmatprep.subr.bf16.mxu0 0
    %289 = vmatpush1.bf16.msra.mxu0 0
    %290 = vmatprep.subr.bf16.mxu0 0
    %291 = vmatpush1.bf16.msra.mxu0 0
    %292 = vmatprep.subr.bf16.mxu0 0
    %293 = vmatpush1.bf16.msra.mxu0 %v276
    %294 = vmatprep.subr.bf16.mxu0 0
    %295 = vmatpush1.bf16.msra.mxu0 %v275
    %296 = vmatprep.subr.bf16.mxu0 0
    %297 = vmatpush1.bf16.msra.mxu0 %v274
    %298 = vmatprep.subr.bf16.mxu0 0
    %299 = vmatpush1.bf16.msra.mxu0 %v273
    %300 = vmatprep.subr.bf16.mxu0 0
    %301 = vmatpush2.bf16.msra.mxu0 0
    %302 = vmatprep.subr.bf16.mxu0 0
    %303 = vmatpush2.bf16.msra.mxu0 0
    %304 = vmatprep.subr.bf16.mxu0 0
    %305 = vmatpush2.bf16.msra.mxu0 0
    %306 = vmatprep.subr.bf16.mxu0 0
    %307 = vmatpush2.bf16.msra.mxu0 0
    %308 = vmatprep.subr.bf16.mxu0 0
    %309 = vmatpush2.bf16.msra.mxu0 0
    %310 = vmatprep.subr.bf16.mxu0 0
    %311 = vmatpush2.bf16.msra.mxu0 0
    %312 = vmatprep.subr.bf16.mxu0 0
    %313 = vmatpush2.bf16.msra.mxu0 0
    %314 = vmatprep.subr.bf16.mxu0 0
    %315 = vmatpush2.bf16.msra.mxu0 0
    %316 = vmatprep.mubr.bf16.mxu0 0
    %317 = vmatmul.mubr.bf16.gmra.mxu0 %v282
    %v318 = vpop.f32.mrf.mxu0
    %v319 = vadd.f32 %v255, %v318
    %v320 = vpop.f32.mrf.mxu0
    %v321 = vpop.f32.mrf.mxu0
    %v322 = vpop.f32.mrf.mxu0
    %323 = vdwg.mxu0
    %v324 = vmax.f32 %v319, 0.0
    %v325 = vpack.c.bf16 %v324, %v324
    %v326 = vld [vmem:[#allocation10] sm:$0xf]
    %v327 = vld [vmem:[#allocation10 + $0x4] sm:$0xf]
    %v328 = vld [vmem:[#allocation10 + $0x8] sm:$0xf]
    %v329 = vld [vmem:[#allocation10 + $0xc] sm:$0xf]
    %v330 = vld [vmem:[#allocation10 + $0x10] sm:$0xf]
    %v331 = vld [vmem:[#allocation10 + $0x14] sm:$0xf]
    %v332 = vld [vmem:[#allocation10 + $0x18] sm:$0xf]
    %v333 = vld [vmem:[#allocation10 + $0x1c] sm:$0xf]
    %v334 = vld [vmem:[%s8] sm:$0x1]
    %v336 = vlaneseq
    %v337 = vshrl.u32 %v336, 7
    %v338 = vsub.s32 0, %v337
    %v339 = vrot.slane %v334, %v338
    %v349 = vunpack.c.l.b16 %v326
    %v350 = vunpack.c.l.b16 %v327
    %v351 = vunpack.c.l.b16 %v328
    %v352 = vunpack.c.l.b16 %v329
    %v353 = vunpack.c.l.b16 %v330
    %v354 = vunpack.c.l.b16 %v331
    %v355 = vunpack.c.l.b16 %v332
    %v356 = vunpack.c.l.b16 %v333
    %v357 = vpack.c.b16 %v350, %v349
    %v358 = vpack.c.b16 %v352, %v351
    %v359 = vpack.c.b16 %v354, %v353
    %v360 = vpack.c.b16 %v356, %v355
    %v366 = vsel %vm196, %v325, 0
    %368 = vmatprep.subr.bf16.mxu0 0
    %369 = vmatpush1.bf16.msra.mxu0 0
    %370 = vmatprep.subr.bf16.mxu0 0
    %371 = vmatpush1.bf16.msra.mxu0 0
    %372 = vmatprep.subr.bf16.mxu0 0
    %373 = vmatpush1.bf16.msra.mxu0 0
    %374 = vmatprep.subr.bf16.mxu0 0
    %375 = vmatpush1.bf16.msra.mxu0 0
    %376 = vmatprep.subr.bf16.mxu0 0
    %377 = vmatpush1.bf16.msra.mxu0 %v360
    %378 = vmatprep.subr.bf16.mxu0 0
    %379 = vmatpush1.bf16.msra.mxu0 %v359
    %380 = vmatprep.subr.bf16.mxu0 0
    %381 = vmatpush1.bf16.msra.mxu0 %v358
    %382 = vmatprep.subr.bf16.mxu0 0
    %383 = vmatpush1.bf16.msra.mxu0 %v357
    %384 = vmatprep.subr.bf16.mxu0 0
    %385 = vmatpush2.bf16.msra.mxu0 0
    %386 = vmatprep.subr.bf16.mxu0 0
    %387 = vmatpush2.bf16.msra.mxu0 0
    %388 = vmatprep.subr.bf16.mxu0 0
    %389 = vmatpush2.bf16.msra.mxu0 0
    %390 = vmatprep.subr.bf16.mxu0 0
    %391 = vmatpush2.bf16.msra.mxu0 0
    %392 = vmatprep.subr.bf16.mxu0 0
    %393 = vmatpush2.bf16.msra.mxu0 0
    %394 = vmatprep.subr.bf16.mxu0 0
    %395 = vmatpush2.bf16.msra.mxu0 0
    %396 = vmatprep.subr.bf16.mxu0 0
    %397 = vmatpush2.bf16.msra.mxu0 0
    %398 = vmatprep.subr.bf16.mxu0 0
    %399 = vmatpush2.bf16.msra.mxu0 0
    %400 = vmatprep.mubr.bf16.mxu0 0
    %401 = vmatmul.mubr.bf16.gmra.mxu0 %v366
    %v402 = vpop.f32.mrf.mxu0
    %v403 = vadd.f32 %v339, %v402
    %v404 = vpop.f32.mrf.mxu0
    %v405 = vpop.f32.mrf.mxu0
    %v406 = vpop.f32.mrf.mxu0
    %407 = vdwg.mxu0
    %408 = vst [vmem:[#allocation11] sm:$0xff] %v403
    // Predicated region
    $region58: #{tpu_custom_call.1} parent=1 // pred_check
      _
    $region59: #{tpu_custom_call.1} parent=1 // pred_check_branch
      %410 = sbr.rel (0) target = $region61
    $region60: #{tpu_custom_call.1} parent=1 // pred_region
      %s412 = ssub.s32 128, 128
      %413 = vsyncadd [#allocation4], %s412
      %s415 = sshll.u32 [#allocation11], 4
      %s416 = int_to_ptr.vmem [resolvable:$true] %s415
      %418 = dma.vmem_to_hbm [thread:$0]  %s416, 128, %s9, [#allocation4]
    $region61: #{tpu_custom_call.1} parent=1 // pred_fallthru
      _
    // Predicated region
    $region62: #{tpu_custom_call.1} parent=1 // pred_check
      _
    $region63: #{tpu_custom_call.1} parent=1 // pred_check_branch
      %420 = sbr.rel (0) target = $region65
    $region64: #{tpu_custom_call.1} parent=1 // pred_region
      %421 = dma.done [#allocation4], 128
    $region65: #{tpu_custom_call.1} parent=1 // pred_fallthru
      _
    %422 = vsyncpa [#allocation3], 1
    %423 = vsyncpa [#allocation6], 1
    %424 = vsyncpa [#allocation9], 1
    %425 = vsyncpa [#allocation4], 1

</llo_original>
